<compile_context>
chip_gen: v5e
topology: v5e:2x2
jax: 0.10.0
libtpu: 0.0.40
codegen_flags: <defaults>
</compile_context>

<pallas_src>
import functools

import jax
import jax.numpy as jnp
from jax.experimental import pallas as pl
from jax.experimental.pallas import tpu as pltpu


# --------------------------------------------------------------------------- #
# Pallas kernel
# --------------------------------------------------------------------------- #
def _encoder_kernel(x_ref, w_ref, b_ref, o_ref):
    # x_ref: [tm, H] bf16   w_ref: [H, Dp] bf16   b_ref: [1, Dp] f32
    # o_ref: [tm, Dp] f32
    acc = jnp.dot(x_ref[...], w_ref[...], preferred_element_type=jnp.float32)
    acc = acc + b_ref[...]              # f32 bias broadcast over rows
    o_ref[...] = jnp.tanh(acc).astype(o_ref.dtype)


def _round_up(n, m):
    return ((n + m - 1) // m) * m


def _pick_row_tile(M):
    """Largest row tile dividing M.

    512 cap keeps double-buffered tiles comfortably inside v7x's 64 MiB VMEM;
    256-multiples feed v6e's 2x256x256 MXU, 128-multiples suit v5e.  Falls
    back to the full extent (always a legal block) for odd small M.
    """
    for t in (512, 256, 128, 64, 32, 16, 8):
        if M % t == 0:
            return t
    return M


def _fused_encoder_pallas(x, w, b):
    """Batched dense encoders.

    x: [E, B, S, H]   w: [E, H, D]   b: [E, D]   ->   [E, B, S, D]
    One pallas_call; grid = (E, M // tm), both axes "parallel".
    """
    E, B, S, H = x.shape
    D = w.shape[-1]
    M = B * S
    Dp = _round_up(D, 128)          # lane-dense output tile
    tm = _pick_row_tile(M)

    # bf16 operands for the MXU; bias stays f32 for the epilogue.
    x2d = x.reshape(E, M, H).astype(jnp.bfloat16)
    w_p = jnp.pad(w.astype(jnp.bfloat16), ((0, 0), (0, 0), (0, Dp - D)))
    b_p = jnp.pad(b.astype(jnp.float32).reshape(E, 1, D),
                  ((0, 0), (0, 0), (0, Dp - D)))

    cost = pl.CostEstimate(
        flops=2 * E * M * H * D,
        transcendentals=E * M * Dp,
        bytes_accessed=(E * M * H * 2) + (E * H * Dp * 2)
        + (E * Dp * 4) + (E * M * Dp * 4),
    )

    out = pl.pallas_call(
        _encoder_kernel,
        out_shape=jax.ShapeDtypeStruct((E, M, Dp), jnp.float32),
        grid_spec=pltpu.PrefetchScalarGridSpec(
            num_scalar_prefetch=0,
            grid=(E, M // tm),
            in_specs=[
                # Activations: new row tile every step along the M axis.
                pl.BlockSpec((None, tm, H), lambda e, m: (e, m, 0)),
                # Weights / bias: constant across M -> stay VMEM-resident.
                pl.BlockSpec((None, H, Dp), lambda e, m: (e, 0, 0)),
                pl.BlockSpec((None, 1, Dp), lambda e, m: (e, 0, 0)),
            ],
            out_specs=pl.BlockSpec((None, tm, Dp), lambda e, m: (e, m, 0)),
        ),
        compiler_params=pltpu.CompilerParams(
            # Encoder axis + row axis are independent -> megacore shardable.
            dimension_semantics=("parallel", "parallel"),
            vmem_limit_bytes=48 * 1024 * 1024,
        ),
        cost_estimate=cost,
    )(x2d, w_p, b_p)

    # Drop the lane padding and restore [E, B, S, D] (free under jit).
    return out[:, :, :D].reshape(E, B, S, D)


# --------------------------------------------------------------------------- #
# Jitted forward wrappers
# --------------------------------------------------------------------------- #
@jax.jit
def _aggregate_fused_forward(q_x, ctx_x, q_w, q_b, ctx_w, ctx_b):
    x = jnp.stack([q_x, ctx_x])      # [2, B, S, H]
    w = jnp.stack([q_w, ctx_w])      # [2, H, D]
    b = jnp.stack([q_b, ctx_b])      # [2, D]
    out = _fused_encoder_pallas(x, w, b)
    return out[0], out[1]


@jax.jit
def _single_encoder_forward(x, w, b):
    return _fused_encoder_pallas(x[None], w[None], b[None])[0]


class DenseEncoder:
    """Synthetic HF-style encoder: enc(x) = (tanh(x @ W + b),)."""

    def __init__(self, w, b):
        self.w = w
        self.b = b

    def __call__(self, x):
        return (_single_encoder_forward(x, self.w, self.b),)


class AggregateModel:
    """JAX/Pallas port of the PyTorch AggregateModel wrapper."""

    def __init__(self, q_encoder, ctx_encoder):
        self.q_encoder = q_encoder
        self.ctx_encoder = ctx_encoder

    def __call__(self, *inputs):
        # Fast path: both encoders are dense and fed a single same-shaped
        # tensor -> fuse both into ONE pallas_call (leading grid axis of 2).
        if (isinstance(self.q_encoder, DenseEncoder)
                and isinstance(self.ctx_encoder, DenseEncoder)
                and len(inputs[0]) == 1 and len(inputs[1]) == 1
                and inputs[0][0].shape == inputs[1][0].shape
                and self.q_encoder.w.shape == self.ctx_encoder.w.shape):
            return _aggregate_fused_forward(
                inputs[0][0], inputs[1][0],
                self.q_encoder.w, self.q_encoder.b,
                self.ctx_encoder.w, self.ctx_encoder.b)
        # General path: original dispatch semantics.
        return (self.q_encoder(*inputs[0])[0], self.ctx_encoder(*inputs[1])[0])


# --------------------------------------------------------------------------- #
# Demo / correctness check
# --------------------------------------------------------------------------- #
if __name__ == "__main__":
    # Small deterministic shapes: batch=2, seq=8, hidden=32, out=32
    B, S, H, D = 2, 8, 32, 32
    key = jax.random.PRNGKey(0)
    k_qx, k_cx, k_qw, k_qb, k_cw, k_cb = jax.random.split(key, 6)

    q_x = jax.random.normal(k_qx, (B, S, H), dtype=jnp.float32)
    ctx_x = jax.random.normal(k_cx, (B, S, H), dtype=jnp.float32)

    q_w = jax.random.normal(k_qw, (H, D), dtype=jnp.float32) * 0.05
    q_b = jax.random.normal(k_qb, (D,), dtype=jnp.float32) * 0.05
    ctx_w = jax.random.normal(k_cw, (H, D), dtype=jnp.float32) * 0.05
    ctx_b = jax.random.normal(k_cb, (D,), dtype=jnp.float32) * 0.05

    model = AggregateModel(DenseEncoder(q_w, q_b), DenseEncoder(ctx_w, ctx_b))

    # inputs[0] / inputs[1] are the arg-tuples for the two encoders
    q_out, ctx_out = model((q_x,), (ctx_x,))
    jax.block_until_ready((q_out, ctx_out))

    # Reference check in plain JAX (f32); kernel uses bf16 MXU operands with
    # an f32 accumulate/epilogue, so use a loosened tolerance.
    q_ref = jnp.tanh(q_x.reshape(B * S, H) @ q_w + q_b).reshape(B, S, D)
    c_ref = jnp.tanh(ctx_x.reshape(B * S, H) @ ctx_w + ctx_b).reshape(B, S, D)
    assert q_out.shape == (B, S, D) and ctx_out.shape == (B, S, D)
    assert jnp.allclose(q_out, q_ref, atol=2e-2, rtol=2e-2)
    assert jnp.allclose(ctx_out, c_ref, atol=2e-2, rtol=2e-2)

    print("KERNEL_OK")
</pallas_src>

<mosaic_0001>
module attributes {stable_mosaic.version = 11 : i64} {
  func.func @_encoder_kernel(%arg0: i32, %arg1: i32, %arg2: memref<1x16x32xbf16, #tpu.memory_space<vmem>>, %arg3: memref<1x32x128xbf16, #tpu.memory_space<vmem>>, %arg4: memref<1x1x128xf32, #tpu.memory_space<vmem>>, %arg5: memref<1x16x128xf32, #tpu.memory_space<vmem>>) attributes {dimension_semantics = [#tpu.dimension_semantics<parallel>, #tpu.dimension_semantics<parallel>], iteration_bounds = array<i64: 2, 1>, scalar_prefetch = 0 : i64, scratch_operands = 0 : i64, tpu.core_type = #tpu.core_type<tc>, window_params = [{transform_indices = @transform_0, window_bounds = array<i64: 1, 16, 32>}, {transform_indices = @transform_1, window_bounds = array<i64: 1, 32, 128>}, {transform_indices = @transform_2, window_bounds = array<i64: 1, 1, 128>}, {transform_indices = @transform_3, window_bounds = array<i64: 1, 16, 128>}]} {
    %c0 = arith.constant 0 : index
    %c0_0 = arith.constant 0 : index
    %c0_1 = arith.constant 0 : index
    %0 = vector.load %arg2[%c0, %c0_0, %c0_1] : memref<1x16x32xbf16, #tpu.memory_space<vmem>>, vector<1x16x32xbf16>
    %1 = vector.shape_cast %0 : vector<1x16x32xbf16> to vector<16x32xbf16>
    %c0_2 = arith.constant 0 : index
    %c0_3 = arith.constant 0 : index
    %c0_4 = arith.constant 0 : index
    %2 = vector.load %arg3[%c0_2, %c0_3, %c0_4] : memref<1x32x128xbf16, #tpu.memory_space<vmem>>, vector<1x32x128xbf16>
    %3 = vector.shape_cast %2 : vector<1x32x128xbf16> to vector<32x128xbf16>
    %cst = arith.constant dense<0.000000e+00> : vector<16x128xf32>
    %4 = tpu.matmul %1, %3, %cst {dimension_numbers = #tpu.dot_dimension_numbers<[1], [0], [0], [1], [0, 0, 1, 1], [], []>} : vector<16x32xbf16>, vector<32x128xbf16>, vector<16x128xf32> -> vector<16x128xf32>
    %c0_5 = arith.constant 0 : index
    %c0_6 = arith.constant 0 : index
    %c0_7 = arith.constant 0 : index
    %5 = vector.load %arg4[%c0_5, %c0_6, %c0_7] : memref<1x1x128xf32, #tpu.memory_space<vmem>>, vector<1x1x128xf32>
    %6 = vector.shape_cast %5 : vector<1x1x128xf32> to vector<1x128xf32>
    %7 = vector.broadcast %6 : vector<1x128xf32> to vector<16x128xf32>
    %8 = arith.addf %4, %7 : vector<16x128xf32>
    %9 = math.tanh %8 : vector<16x128xf32>
    %c0_8 = arith.constant 0 : index
    %c0_9 = arith.constant 0 : index
    %c0_10 = arith.constant 0 : index
    %10 = vector.load %arg5[%c0_8, %c0_9, %c0_10] : memref<1x16x128xf32, #tpu.memory_space<vmem>>, vector<1x16x128xf32>
    %11 = vector.shape_cast %10 : vector<1x16x128xf32> to vector<16x128xf32>
    %12 = vector.shape_cast %9 : vector<16x128xf32> to vector<1x16x128xf32>
    tpu.vector_store %arg5[%c0_8, %c0_9, %c0_10], %12 {strides = array<i32>} : memref<1x16x128xf32, #tpu.memory_space<vmem>>, vector<1x16x128xf32>,
    return
  }
  func.func @transform_0(%arg0: i32, %arg1: i32) -> (i32, i32, i32) {
    %c0_i32 = arith.constant 0 : i32
    %c0_i32_0 = arith.constant 0 : i32
    return %arg0, %arg1, %c0_i32 : i32, i32, i32
  }
  func.func @transform_1(%arg0: i32, %arg1: i32) -> (i32, i32, i32) {
    %c0_i32 = arith.constant 0 : i32
    %c0_i32_0 = arith.constant 0 : i32
    %c0_i32_1 = arith.constant 0 : i32
    return %arg0, %c0_i32, %c0_i32_0 : i32, i32, i32
  }
  func.func @transform_2(%arg0: i32, %arg1: i32) -> (i32, i32, i32) {
    %c0_i32 = arith.constant 0 : i32
    %c0_i32_0 = arith.constant 0 : i32
    %c0_i32_1 = arith.constant 0 : i32
    return %arg0, %c0_i32, %c0_i32_0 : i32, i32, i32
  }
  func.func @transform_3(%arg0: i32, %arg1: i32) -> (i32, i32, i32) {
    %c0_i32 = arith.constant 0 : i32
    %c0_i32_0 = arith.constant 0 : i32
    return %arg0, %arg1, %c0_i32 : i32, i32, i32
  }
}

</mosaic_0001>

<llo_original>
// kernel: _aggregate_fused_forward.1
$region0: #{_aggregate_fused_forward.1}
  #allocation0 [shape = 'u32[]', space=smem, size = 0x4, offset = 0x4, fixed_abs, tag = 'smem constant byte address 0x4 - core index']
  #allocation1 [shape = 'u32[72,128]{1,0:T(1,128)}', space=vmem, size = 0x9000, scoped, tag = 'internal scratch']
  %s0 = inlined_call_operand.vmem [shape: bf16[2,16,32], index: 0, kind: input, shape index: {}]
  %s1 = inlined_call_operand.vmem [shape: bf16[2,32,128], index: 1, kind: input, shape index: {}]
  %s2 = inlined_call_operand.vmem [shape: f32[2,1,128], index: 2, kind: input, shape index: {}]
  %s3 = inlined_call_operand.vmem [shape: f32[2,16,128], index: 3, kind: output, shape index: {}]
  %s4 = sld [smem:[#allocation0]]
  $region45: #{_aggregate_fused_forward.1} parent=0
    _
  %s6 = ssub.s32 1, %s4
  %s7 = scalar_select 0, %s6, %s4
  loop: start=0, step=1, limit=4
  $region2: #{_aggregate_fused_forward.1} parent=0 // loop_pre_header
    _
  $region3: #{_aggregate_fused_forward.1} parent=0 // loop_header
    %s9 = sphi 0, %s13
    %p10 = scmp.ge.s32.totalorder %s9, 4
    %s16 = sphi 0, %s28
    %s17 = sphi 0, %s24
    %s18 = sphi 0, %s16
    %s19 = sphi 0, %s17
    %s20 = sphi 0, %s18
    %s21 = sphi 0, %s19
    %s33 = sphi 0, %s35
    %s36 = sphi 0, %s33
    %s37 = sphi 0, %s36
    %s53 = sphi 0, %s37
    %s59 = sphi 0, %s61
    %s62 = sphi 0, %s59
    %s63 = sphi 0, %s62
    %s79 = sphi 0, %s63
    %s85 = sphi 0, %s87
    %s88 = sphi 0, %s85
    %s89 = sphi 0, %s88
    %s105 = sphi 0, %s89
    %s113 = sphi 0, %s115
    %s116 = sphi 0, %s113
    %s117 = sphi 0, %s116
    %s133 = sphi 0, %s117
  $region4: #{_aggregate_fused_forward.1} parent=0 // loop_header_branch
    %12 = sbr.rel (%p10) target = $region8
  $region5: #{_aggregate_fused_forward.1} parent=0 // loop_body
    %s14 = ssub.s32 %s9, 1
    %s15 = ssub.s32 %s9, 2
    %s22 = sadd.s32 1, %s17
    %p23 = scmp.ge.s32.totalorder %s22, 1
    %s24 = scalar_select %p23, 0, %s22
    %s25 = sadd.s32 1, %s16
    %s26 = scalar_select %p23, %s25, %s16
    %p27 = scmp.ge.s32.totalorder %s26, 2
    %s28 = scalar_select %p27, 0, %s26
    %s29 = ssub.s32 %s16, %s28
    %s30 = ssub.s32 %s17, %s24
    %s31 = sor.u32 %s29, %s30
    %p32 = scmp.eq.s32.totalorder %s31, 0
    %s34 = sadd.s32 %s33, 1
    %s35 = scalar_select %p32, %s33, %s34
    %p38 = pneg %p32
    %p39 = scmp.eq.s32.totalorder %s9, 1
    %p40 = por %p38, %p39
    %p41 = scmp.ne.s32.totalorder %s33, %s36
    %p42 = scmp.eq.s32.totalorder %s9, 0
    %p43 = por %p41, %p42
    %p44 = scmp.ne.s32.totalorder %s33, %s36
    %p45 = scmp.eq.s32.totalorder %s14, 1
    %p46 = por %p44, %p45
    %p47 = scmp.ne.s32.totalorder %s36, %s37
    %p48 = scmp.eq.s32.totalorder %s14, 0
    %p49 = por %p47, %p48
    %p50 = scmp.ne.s32.totalorder %s36, %s37
    %p51 = scmp.eq.s32.totalorder %s15, 1
    %p52 = por %p50, %p51
    %p54 = scmp.ne.s32.totalorder %s37, %s53
    %p55 = scmp.eq.s32.totalorder %s15, 0
    %p56 = por %p54, %p55
    %s57 = ssub.s32 %s16, %s28
    %p58 = scmp.eq.s32.totalorder %s57, 0
    %s60 = sadd.s32 %s59, 1
    %s61 = scalar_select %p58, %s59, %s60
    %p64 = pneg %p58
    %p65 = scmp.eq.s32.totalorder %s9, 1
    %p66 = por %p64, %p65
    %p67 = scmp.ne.s32.totalorder %s59, %s62
    %p68 = scmp.eq.s32.totalorder %s9, 0
    %p69 = por %p67, %p68
    %p70 = scmp.ne.s32.totalorder %s59, %s62
    %p71 = scmp.eq.s32.totalorder %s14, 1
    %p72 = por %p70, %p71
    %p73 = scmp.ne.s32.totalorder %s62, %s63
    %p74 = scmp.eq.s32.totalorder %s14, 0
    %p75 = por %p73, %p74
    %p76 = scmp.ne.s32.totalorder %s62, %s63
    %p77 = scmp.eq.s32.totalorder %s15, 1
    %p78 = por %p76, %p77
    %p80 = scmp.ne.s32.totalorder %s63, %s79
    %p81 = scmp.eq.s32.totalorder %s15, 0
    %p82 = por %p80, %p81
    %s83 = ssub.s32 %s16, %s28
    %p84 = scmp.eq.s32.totalorder %s83, 0
    %s86 = sadd.s32 %s85, 1
    %s87 = scalar_select %p84, %s85, %s86
    %p90 = pneg %p84
    %p91 = scmp.eq.s32.totalorder %s9, 1
    %p92 = por %p90, %p91
    %p93 = scmp.ne.s32.totalorder %s85, %s88
    %p94 = scmp.eq.s32.totalorder %s9, 0
    %p95 = por %p93, %p94
    %p96 = scmp.ne.s32.totalorder %s85, %s88
    %p97 = scmp.eq.s32.totalorder %s14, 1
    %p98 = por %p96, %p97
    %p99 = scmp.ne.s32.totalorder %s88, %s89
    %p100 = scmp.eq.s32.totalorder %s14, 0
    %p101 = por %p99, %p100
    %p102 = scmp.ne.s32.totalorder %s88, %s89
    %p103 = scmp.eq.s32.totalorder %s15, 1
    %p104 = por %p102, %p103
    %p106 = scmp.ne.s32.totalorder %s89, %s105
    %p107 = scmp.eq.s32.totalorder %s15, 0
    %p108 = por %p106, %p107
    %s109 = ssub.s32 %s16, %s28
    %s110 = ssub.s32 %s17, %s24
    %s111 = sor.u32 %s109, %s110
    %p112 = scmp.eq.s32.totalorder %s111, 0
    %s114 = sadd.s32 %s113, 1
    %s115 = scalar_select %p112, %s113, %s114
    %p118 = pneg %p112
    %p119 = scmp.eq.s32.totalorder %s9, 1
    %p120 = por %p118, %p119
    %p121 = scmp.ne.s32.totalorder %s113, %s116
    %p122 = scmp.eq.s32.totalorder %s9, 0
    %p123 = por %p121, %p122
    %p124 = scmp.ne.s32.totalorder %s113, %s116
    %p125 = scmp.eq.s32.totalorder %s14, 1
    %p126 = por %p124, %p125
    %p127 = scmp.ne.s32.totalorder %s116, %s117
    %p128 = scmp.eq.s32.totalorder %s14, 0
    %p129 = por %p127, %p128
    %p130 = scmp.ne.s32.totalorder %s116, %s117
    %p131 = scmp.eq.s32.totalorder %s15, 1
    %p132 = por %p130, %p131
    %p134 = scmp.ne.s32.totalorder %s117, %s133
    %p135 = scmp.eq.s32.totalorder %s15, 0
    %p136 = por %p134, %p135
    %p137 = scmp.le.s32.totalorder 1, %s9
    %p138 = scmp.lt.s32.totalorder %s9, 3
    %p139 = pnand %p137, %p138
    %p140 = pneg %p139
    // Predicated region
    $region9: #{_aggregate_fused_forward.1} parent=5 // pred_check
      _
    $region10: #{_aggregate_fused_forward.1} parent=5 // pred_check_branch
      %142 = sbr.rel (%p139) target = $region12
    $region11: #{_aggregate_fused_forward.1} parent=5 // pred_region
      %s143 = ssub.s32 %s9, 1
    $region12: #{_aggregate_fused_forward.1} parent=5 // pred_fallthru
      _
    %p144 = scmp.lt.s32.totalorder %s9, 2
    // Predicated region
    $region13: #{_aggregate_fused_forward.1} parent=5 // pred_check
      %p145 = pneg %p144
    $region14: #{_aggregate_fused_forward.1} parent=5 // pred_check_branch
      %147 = sbr.rel (%p145) target = $region16
    $region15: #{_aggregate_fused_forward.1} parent=5 // pred_region
      // Predicated region
      $region17: #{_aggregate_fused_forward.1} parent=15 // pred_check
        %p148 = pneg %p43
      $region18: #{_aggregate_fused_forward.1} parent=15 // pred_check_branch
        %150 = sbr.rel (%p148) target = $region20
      $region19: #{_aggregate_fused_forward.1} parent=15 // pred_region
        %s151 = smul.u32 2, %s17
        %p152 = scmp.lt.s32.totalorder %s16, 1
        %s153 = scalar_select %p152, %s16, 1
        %p154 = scmp.lt.s32.totalorder %s151, 1
        %s155 = scalar_select %p154, %s151, 1
        %s156 = smul.addr %s153, 2
        %s157 = sadd.s32 %s155, %s156
        %s158 = smul.addr %s157, 4
        %s159 = scalar_lea.vmem %s0, %s158
        %s160 = smul.u32 2, %s17
      $region20: #{_aggregate_fused_forward.1} parent=15 // pred_fallthru
        _
      // Predicated region
      $region21: #{_aggregate_fused_forward.1} parent=15 // pred_check
        %p161 = pneg %p69
      $region22: #{_aggregate_fused_forward.1} parent=15 // pred_check_branch
        %163 = sbr.rel (%p161) target = $region24
      $region23: #{_aggregate_fused_forward.1} parent=15 // pred_region
        %p164 = scmp.lt.s32.totalorder %s16, 1
        %s165 = scalar_select %p164, %s16, 1
        %s166 = smul.addr %s165, 4
        %s167 = smul.addr %s166, 4
        %s168 = scalar_lea.vmem %s1, %s167
      $region24: #{_aggregate_fused_forward.1} parent=15 // pred_fallthru
        _
      // Predicated region
      $region25: #{_aggregate_fused_forward.1} parent=15 // pred_check
        %p169 = pneg %p95
      $region26: #{_aggregate_fused_forward.1} parent=15 // pred_check_branch
        %171 = sbr.rel (%p169) target = $region28
      $region27: #{_aggregate_fused_forward.1} parent=15 // pred_region
        %p172 = scmp.lt.s32.totalorder %s16, 1
        %s173 = scalar_select %p172, %s16, 1
        %s174 = scalar_lea.vmem %s2, %s173
      $region28: #{_aggregate_fused_forward.1} parent=15 // pred_fallthru
        _
    $region16: #{_aggregate_fused_forward.1} parent=5 // pred_fallthru
      _
    %p175 = scmp.le.s32.totalorder 1, %s9
    %p176 = scmp.lt.s32.totalorder %s9, 3
    %p177 = pnand %p175, %p176
    %p178 = pneg %p177
    // Predicated region
    $region29: #{_aggregate_fused_forward.1} parent=5 // pred_check
      _
    $region30: #{_aggregate_fused_forward.1} parent=5 // pred_check_branch
      %180 = sbr.rel (%p177) target = $region32
    $region31: #{_aggregate_fused_forward.1} parent=5 // pred_region
      %s181 = ssub.s32 %s9, 1
      %s182 = smul.u32 2, %s19
      %p183 = scmp.lt.s32.totalorder %s18, 1
      %s184 = scalar_select %p183, %s18, 1
      %p185 = scmp.lt.s32.totalorder %s182, 1
      %s186 = scalar_select %p185, %s182, 1
      %s187 = smul.addr %s184, 2
      %s188 = sadd.s32 %s186, %s187
      %s189 = smul.addr %s188, 4
      %s190 = scalar_lea.vmem %s0, %s189
      %p191 = pneg %p49
      %p192 = pneg %p46
      %p193 = scmp.lt.s32.totalorder %s18, 1
      %s194 = scalar_select %p193, %s18, 1
      %s195 = smul.addr %s194, 4
      %s196 = smul.addr %s195, 4
      %s197 = scalar_lea.vmem %s1, %s196
      %p198 = pneg %p75
      %p199 = pneg %p72
      %p200 = scmp.lt.s32.totalorder %s18, 1
      %s201 = scalar_select %p200, %s18, 1
      %s202 = scalar_lea.vmem %s2, %s201
      %p203 = pneg %p101
      %p204 = pneg %p98
      %p205 = pneg %p129
      %p206 = pneg %p126
      %s207 = smul.u32 2, %s19
      %p208 = scmp.lt.s32.totalorder %s18, 1
      %s209 = scalar_select %p208, %s18, 1
      %p210 = scmp.lt.s32.totalorder %s207, 1
      %s211 = scalar_select %p210, %s207, 1
      %s212 = smul.addr %s209, 2
      %s213 = sadd.s32 %s211, %s212
      %s214 = smul.addr %s213, 8
      %s215 = scalar_lea.vmem %s3, %s214
      %s216 = smul.u32 2, %s19
      %p217 = scmp.lt.s32.totalorder %s18, 1
      %s218 = scalar_select %p217, %s18, 1
      %p219 = scmp.lt.s32.totalorder %s216, 1
      %s220 = scalar_select %p219, %s216, 1
      %s221 = smul.addr %s218, 2
      %s222 = sadd.s32 %s220, %s221
      %s223 = smul.addr %s222, 4
      %s224 = scalar_lea.vmem %s0, %s223
      %s225 = smul.u32 2, %s19
      %p226 = scmp.lt.s32.totalorder %s18, 1
      %s227 = scalar_select %p226, %s18, 1
      %s228 = smul.addr %s227, 4
      %s229 = smul.addr %s228, 4
      %s230 = scalar_lea.vmem %s1, %s229
      %p231 = scmp.lt.s32.totalorder %s18, 1
      %s232 = scalar_select %p231, %s18, 1
      %s233 = scalar_lea.vmem %s2, %s232
      %s234 = smul.u32 2, %s19
      %p235 = scmp.lt.s32.totalorder %s18, 1
      %s236 = scalar_select %p235, %s18, 1
      %p237 = scmp.lt.s32.totalorder %s234, 1
      %s238 = scalar_select %p237, %s234, 1
      %s239 = smul.addr %s236, 2
      %s240 = sadd.s32 %s238, %s239
      %s241 = smul.addr %s240, 8
      %s242 = scalar_lea.vmem %s3, %s241
      %s243 = smul.u32 2, %s19
      %v245 = vld [vmem:[%s224] sm:$0xf]
      %v246 = vld [vmem:[%s224 + $0x4] sm:$0xf]
      %v247 = vld [vmem:[%s230] sm:$0xf]
      %v248 = vld [vmem:[%s230 + $0x4] sm:$0xf]
      %v249 = vld [vmem:[%s230 + $0x8] sm:$0xf]
      %v250 = vld [vmem:[%s230 + $0xc] sm:$0xf]
      %v251 = vld [vmem:[%s233] sm:$0x1]
      %v253 = vperm.slane %v251, 0
      %v257 = vunpack.c.l.b16 %v245
      %v258 = vunpack.c.l.b16 %v246
      %v259 = vpack.c.b16 %v258, %v257
      %v264 = vunpack.c.l.b16 %v247
      %v265 = vunpack.c.l.b16 %v248
      %v266 = vunpack.c.l.b16 %v249
      %v267 = vunpack.c.l.b16 %v250
      %v268 = vpack.c.b16 %v265, %v264
      %v269 = vpack.c.b16 %v267, %v266
      %vm272 = vcmask 261120
      %v274 = vsel %vm272, %v259, 0
      %276 = vmatpush.bf16.msra.mxu0 0
      %277 = vmatpush.bf16.msra.mxu0 0
      %278 = vmatpush.bf16.msra.mxu0 0
      %279 = vmatpush.bf16.msra.mxu0 0
      %280 = vmatpush.bf16.msra.mxu0 0
      %281 = vmatpush.bf16.msra.mxu0 0
      %282 = vmatpush.bf16.msra.mxu0 %v269
      %283 = vmatpush.bf16.msra.mxu0 %v268
      %284 = vmatmul.bf16.gmra.mxu0 %v274
      %v285 = vpop.f32.mrf.mxu0
      %v286 = vadd.f32 %v253, %v285
      %v287 = vpop.f32.mrf.mxu0
      %v288 = vadd.f32 %v253, %v287
      %289 = vdwg.mxu0
      %v290 = vtanh.pop %v286
      %v291 = vtanh.pop %v288
      %292 = vst [vmem:[%s242] sm:$0xff] %v290
      %293 = vst [vmem:[%s242 + $0x8] sm:$0xff] %v291
      %s294 = smul.u32 2, %s19
      %p295 = scmp.lt.s32.totalorder %s18, 1
      %s296 = scalar_select %p295, %s18, 1
      %p297 = scmp.lt.s32.totalorder %s294, 1
      %s298 = scalar_select %p297, %s294, 1
      %s299 = smul.addr %s296, 2
      %s300 = sadd.s32 %s298, %s299
      %s301 = smul.addr %s300, 8
      %s302 = scalar_lea.vmem %s3, %s301
      // Predicated region
      $region33: #{_aggregate_fused_forward.1} parent=31 // pred_check
        %p303 = pneg %p126
      $region34: #{_aggregate_fused_forward.1} parent=31 // pred_check_branch
        %305 = sbr.rel (%p303) target = $region36
      $region35: #{_aggregate_fused_forward.1} parent=31 // pred_region
        %s306 = smul.u32 2, %s19
      $region36: #{_aggregate_fused_forward.1} parent=31 // pred_fallthru
        _
    $region32: #{_aggregate_fused_forward.1} parent=5 // pred_fallthru
      _
    %p307 = scmp.le.s32.totalorder 2, %s9
    // Predicated region
    $region37: #{_aggregate_fused_forward.1} parent=5 // pred_check
      %p308 = pneg %p307
    $region38: #{_aggregate_fused_forward.1} parent=5 // pred_check_branch
      %310 = sbr.rel (%p308) target = $region40
    $region39: #{_aggregate_fused_forward.1} parent=5 // pred_region
      %s311 = ssub.s32 %s9, 2
      // Predicated region
      $region41: #{_aggregate_fused_forward.1} parent=39 // pred_check
        %p312 = pneg %p132
      $region42: #{_aggregate_fused_forward.1} parent=39 // pred_check_branch
        %314 = sbr.rel (%p312) target = $region44
      $region43: #{_aggregate_fused_forward.1} parent=39 // pred_region
        %s315 = smul.u32 2, %s21
        %p316 = scmp.lt.s32.totalorder %s20, 1
        %s317 = scalar_select %p316, %s20, 1
        %p318 = scmp.lt.s32.totalorder %s315, 1
        %s319 = scalar_select %p318, %s315, 1
        %s320 = smul.addr %s317, 2
        %s321 = sadd.s32 %s319, %s320
        %s322 = smul.addr %s321, 8
        %s323 = scalar_lea.vmem %s3, %s322
      $region44: #{_aggregate_fused_forward.1} parent=39 // pred_fallthru
        _
    $region40: #{_aggregate_fused_forward.1} parent=5 // pred_fallthru
      _
  $region6: #{_aggregate_fused_forward.1} parent=0 // loop_footer
    %s13 = sadd.s32 1, %s9
  $region7: #{_aggregate_fused_forward.1} parent=0 // loop_footer_branch
    %8 = sbr.rel target = $region3
  $region8: #{_aggregate_fused_forward.1} parent=0 // loop_exit
    _

</llo_original>
